<compile_context>
chip_gen: v7x
topology: tpu7x:2x2x1
jax: 0.10.0
libtpu: 0.0.40
codegen_flags: <defaults>
</compile_context>

<pallas_src>
import functools

import jax
import jax.numpy as jnp
from jax.experimental import pallas as pl
from jax.experimental.pallas import tpu as pltpu

LANE = 128
SUBLANE = 8


def _round_down(v, m):
    return (v // m) * m


def _cdiv(a, b):
    return -(-a // b)


def _row_align(dtype):
    # Second-to-last block dim must be a multiple of the sublane packing factor:
    # 8 for 4-byte dtypes, 16 for 2-byte (bf16), 32 for 1-byte.
    itemsize = jnp.dtype(dtype).itemsize
    return max(SUBLANE, SUBLANE * (4 // max(itemsize, 1)))


@functools.lru_cache(maxsize=1)
def _tpu_config():
    """Returns (num_tensorcores_to_split_over, target_bytes_per_input_block)."""
    kind = ""
    try:
        kind = (getattr(jax.devices()[0], "device_kind", "") or "").lower()
    except Exception:  # no device info -> conservative defaults
        pass
    if "v7" in kind:
        # 2 TCs, ~3.2 TB/s HBM: bigger blocks amortize the ~0.35 us per-grid-step overhead.
        # 2 inputs x 2 pipeline buffers x 4 MiB = 16 MiB, inside the 32 MiB scoped default.
        return 2, 4 << 20
    if "v6" in kind:
        return 1, 2 << 20
    if "v5p" in kind or "v4" in kind:
        return 2, 2 << 20
    # v5e / unknown: 16 MiB scoped-VMEM default -> stay at 1 MiB per input block.
    return 1, 1 << 20


def _sse_kernel(x_ref, t_ref, out_ref, *, total_rows, block_rows, chunks_per_par, masked):
    """Accumulate sum((x - t)^2) into this parallel slot's (8, 128) f32 partial."""
    c = pl.program_id(0)  # parallel (TensorCore) axis
    i = pl.program_id(1)  # reduction ("arbitrary") axis

    @pl.when(i == 0)
    def _():
        out_ref[...] = jnp.zeros_like(out_ref)

    d = x_ref[...].astype(jnp.float32) - t_ref[...].astype(jnp.float32)
    sq = d * d

    if masked:
        # Zero rows past the true end of the slab: handles the ragged last block and any
        # duplicated (index-clamped) block on the parallel axis, without padding in HBM.
        row0 = (c * chunks_per_par + i) * block_rows
        local_row = jax.lax.broadcasted_iota(jnp.int32, sq.shape, 0)
        sq = jnp.where(row0 + local_row < total_rows, sq, 0.0)

    # (block_rows, 128) -> (block_rows//8, 8, 128): pure VPU adds keep the accumulator
    # vreg-shaped; the single cross-lane reduce happens on (8, 128) in the wrapper jit.
    out_ref[...] += jnp.sum(sq.reshape(-1, SUBLANE, LANE), axis=0)


def _sse_slab_pallas(x_slab, t_slab):
    """sum((x_slab - t_slab)^2) for a (rows, 128) lane-dense slab, rows >= row alignment."""
    rows, lane = x_slab.shape
    assert lane == LANE
    itemsize = jnp.dtype(x_slab.dtype).itemsize
    align = _row_align(x_slab.dtype)
    n_cores, block_bytes = _tpu_config()

    # dtype-aware block sizing: constant bytes per (double-buffered) input block.
    target_rows = max(align, _round_down(block_bytes // (LANE * itemsize), align))
    block_rows = min(target_rows, _round_down(rows, align))
    n_chunks = _cdiv(rows, block_rows)
    n_par = n_cores if (n_cores > 1 and n_chunks >= 2) else 1
    chunks_per_par = _cdiv(n_chunks, n_par)
    masked = (n_par * chunks_per_par * block_rows) != rows

    if n_par * chunks_per_par == n_chunks:
        def idx_map(c, i):
            return (c * chunks_per_par + i, 0)
    else:
        # Last parallel slot has fewer real chunks: clamp the block index so the DMA stays
        # in bounds; the in-kernel mask (computed from the *unclamped* chunk id) zeroes the
        # duplicated contribution.
        def idx_map(c, i):
            return (jnp.minimum(c * chunks_per_par + i, n_chunks - 1), 0)

    kernel = functools.partial(
        _sse_kernel, total_rows=rows, block_rows=block_rows,
        chunks_per_par=chunks_per_par, masked=masked)

    partials = pl.pallas_call(
        kernel,
        out_shape=jax.ShapeDtypeStruct((n_par * SUBLANE, LANE), jnp.float32),
        grid_spec=pltpu.PrefetchScalarGridSpec(
            num_scalar_prefetch=0,
            grid=(n_par, chunks_per_par),
            in_specs=[
                pl.BlockSpec((block_rows, LANE), idx_map),
                pl.BlockSpec((block_rows, LANE), idx_map),
            ],
            # Per-parallel-slot (8, 128) partial; resident across the reduction axis.
            out_specs=pl.BlockSpec((SUBLANE, LANE), lambda c, i: (c, 0)),
        ),
        compiler_params=pltpu.CompilerParams(
            # On multi-TC chips the leading "parallel" axis lets the cores split the HBM
            # stream; pltpu.CORE_PARALLEL is a v7x tuning knob to try here.
            dimension_semantics=("parallel", "arbitrary"),
        ),
        cost_estimate=pl.CostEstimate(
            flops=3 * rows * LANE,
            bytes_accessed=2 * rows * LANE * itemsize + n_par * SUBLANE * LANE * 4,
            transcendentals=0,
        ),
    )(x_slab, t_slab)

    return jnp.sum(partials)


def _sse_slab(x_slab, t_slab):
    rows = x_slab.shape[0]
    if rows < _row_align(x_slab.dtype):
        # Too small to tile; a kernel launch would be pure overhead.
        d = x_slab.astype(jnp.float32) - t_slab.astype(jnp.float32)
        return jnp.sum(d * d)
    return _sse_slab_pallas(x_slab, t_slab)


def _layout(a):
    """Flatten to a lane-dense (rows, 128) slab plus an optional sub-128-element tail.

    When a.size % 128 == 0 (typical conv feature maps) this is a free reshape: no padding,
    no HBM copy.  Otherwise only the < 128-element tail is split off for a plain-JAX reduce.
    """
    flat = a.reshape(-1)
    n = flat.shape[0]
    rows = n // LANE
    if rows == 0:
        return None, flat
    main_n = rows * LANE
    if main_n == n:
        return flat.reshape(rows, LANE), None
    return flat[:main_n].reshape(rows, LANE), flat[main_n:]


@jax.jit
def _weighted_mse_from_parts(x, t_slab, t_tail, weight):
    """mean((x - target)^2) * weight with the target already laid out as (slab, tail)."""
    x_slab, x_tail = _layout(x)
    sse = jnp.float32(0.0)
    if x_slab is not None:
        sse = sse + _sse_slab(x_slab, t_slab)
    if x_tail is not None:
        d = x_tail.astype(jnp.float32) - t_tail.astype(jnp.float32)
        sse = sse + jnp.sum(d * d)
    return sse * (weight / jnp.float32(x.size))


def mse_loss_weighted(x, target, weight):
    """mean((x - target)^2) * weight computed with the Pallas kernel. Returns f32 scalar."""
    assert x.shape == target.shape, "input / target shape mismatch"
    t_slab, t_tail = _layout(target)
    return _weighted_mse_from_parts(x, t_slab, t_tail, jnp.float32(weight))


class ContentLoss:
    """JAX/Pallas port of the PyTorch ContentLoss module (forward semantics only)."""

    # TODO(synk): forward-only — the pallas_call has no custom_vjp, so this module cannot be
    # differentiated with jax.grad (fine for the stated feedforward texture-transfer use).

    def __init__(self, weight, mode=None):
        self.weight = weight
        self.mode = mode
        self.target = None
        self.loss = jnp.float32(0.0)
        self.input = None
        self._t_slab = None
        self._t_tail = None

    def __call__(self, x):
        self.input = x
        if self.mode == "capture":
            # .detach() -> stop_gradient + store.  Pre-lay-out the lane-dense slab once so
            # every subsequent loss call reuses it without re-flattening / re-copying.
            self.target = jax.lax.stop_gradient(x)
            self._t_slab, self._t_tail = _layout(self.target)
        elif self.mode == "loss":
            self.loss = _weighted_mse_from_parts(
                x, self._t_slab, self._t_tail, jnp.float32(self.weight))
        return x


if __name__ == "__main__":
    key = jax.random.PRNGKey(0)
    k1, k2, k3, k4, k5, k6 = jax.random.split(key, 6)

    # NCHW, matching the PyTorch conv-feature layout this module sits behind.
    B, C, H, W = 2, 4, 16, 16
    x_capture = jax.random.normal(k1, (B, C, H, W), dtype=jnp.float32)
    x_input = jax.random.normal(k2, (B, C, H, W), dtype=jnp.float32)

    weight = 5.0
    cl = ContentLoss(weight=weight, mode="capture")
    out_cap = cl(x_capture)            # capture pass: stores target, identity pass-through

    cl.mode = "loss"
    out = cl(x_input)                  # loss pass

    out = jax.block_until_ready(out)
    loss_val = jax.block_until_ready(cl.loss)

    ref = jnp.mean((x_input - x_capture) ** 2) * weight
    assert jnp.allclose(loss_val, ref, rtol=1e-5, atol=1e-6), (loss_val, ref)
    assert jnp.array_equal(out, x_input)  # identity pass-through

    # Multi-chunk + ragged-last-block + sub-128-element tail path (2*8*33*17 = 8976 elems).
    y_t = jax.random.normal(k3, (2, 8, 33, 17), dtype=jnp.float32)
    y_x = jax.random.normal(k4, (2, 8, 33, 17), dtype=jnp.float32)
    loss2 = jax.block_until_ready(mse_loss_weighted(y_x, y_t, 2.5))
    ref2 = jnp.mean((y_x - y_t) ** 2) * 2.5
    assert jnp.allclose(loss2, ref2, rtol=1e-5, atol=1e-6), (loss2, ref2)

    # bf16 inputs: dtype-aware tiling, in-kernel upcast, ragged last block (125 rows).
    z_t = jax.random.normal(k5, (2, 5, 40, 40), dtype=jnp.bfloat16)
    z_x = jax.random.normal(k6, (2, 5, 40, 40), dtype=jnp.bfloat16)
    loss3 = jax.block_until_ready(mse_loss_weighted(z_x, z_t, 0.5))
    ref3 = jnp.mean((z_x.astype(jnp.float32) - z_t.astype(jnp.float32)) ** 2) * 0.5
    assert jnp.allclose(loss3, ref3, rtol=1e-5, atol=1e-6), (loss3, ref3)

    print("KERNEL_OK")
</pallas_src>

<mosaic_0001>
module attributes {stable_mosaic.version = 11 : i64} {
  func.func @_sse_kernel(%arg0: i32, %arg1: i32, %arg2: memref<16x128xf32, #tpu.memory_space<vmem>>, %arg3: memref<16x128xf32, #tpu.memory_space<vmem>>, %arg4: memref<8x128xf32, #tpu.memory_space<vmem>>) attributes {dimension_semantics = [#tpu.dimension_semantics<parallel>, #tpu.dimension_semantics<arbitrary>], iteration_bounds = array<i64: 1, 1>, scalar_prefetch = 0 : i64, scratch_operands = 0 : i64, tpu.core_type = #tpu.core_type<tc>, window_params = [{transform_indices = @transform_0, window_bounds = array<i64: 16, 128>}, {transform_indices = @transform_1, window_bounds = array<i64: 16, 128>}, {transform_indices = @transform_2, window_bounds = array<i64: 8, 128>}]} {
    %c0_i32 = arith.constant 0 : i32
    %0 = arith.cmpi eq, %arg1, %c0_i32 : i32
    %1 = arith.extui %0 : i1 to i32
    %c0_i32_0 = arith.constant 0 : i32
    %2 = arith.cmpi ne, %1, %c0_i32_0 : i32
    scf.if %2 {
      %cst_8 = arith.constant 0.000000e+00 : f32
      %12 = vector.broadcast %cst_8 : f32 to vector<8x128xf32>
      %c0_9 = arith.constant 0 : index
      %c0_10 = arith.constant 0 : index
      %13 = vector.load %arg4[%c0_9, %c0_10] : memref<8x128xf32, #tpu.memory_space<vmem>>, vector<8x128xf32>
      tpu.vector_store %arg4[%c0_9, %c0_10], %12 {strides = array<i32>} : memref<8x128xf32, #tpu.memory_space<vmem>>, vector<8x128xf32>,
    } else {
    }
    %c0 = arith.constant 0 : index
    %c0_1 = arith.constant 0 : index
    %3 = vector.load %arg2[%c0, %c0_1] : memref<16x128xf32, #tpu.memory_space<vmem>>, vector<16x128xf32>
    %c0_2 = arith.constant 0 : index
    %c0_3 = arith.constant 0 : index
    %4 = vector.load %arg3[%c0_2, %c0_3] : memref<16x128xf32, #tpu.memory_space<vmem>>, vector<16x128xf32>
    %5 = arith.subf %3, %4 : vector<16x128xf32>
    %6 = arith.mulf %5, %5 : vector<16x128xf32>
    %c0_4 = arith.constant 0 : index
    %c0_5 = arith.constant 0 : index
    %7 = vector.load %arg4[%c0_4, %c0_5] : memref<8x128xf32, #tpu.memory_space<vmem>>, vector<8x128xf32>
    %8 = vector.shape_cast %6 : vector<16x128xf32> to vector<2x8x128xf32>
    %cst = arith.constant dense<0.000000e+00> : vector<8x128xf32>
    %9 = vector.multi_reduction <add>, %8, %cst [0] : vector<2x8x128xf32> to vector<8x128xf32>
    %10 = arith.addf %7, %9 : vector<8x128xf32>
    %c0_6 = arith.constant 0 : index
    %c0_7 = arith.constant 0 : index
    %11 = vector.load %arg4[%c0_6, %c0_7] : memref<8x128xf32, #tpu.memory_space<vmem>>, vector<8x128xf32>
    tpu.vector_store %arg4[%c0_6, %c0_7], %10 {strides = array<i32>} : memref<8x128xf32, #tpu.memory_space<vmem>>, vector<8x128xf32>,
    return
  }
  func.func @transform_0(%arg0: i32, %arg1: i32) -> (i32, i32) {
    %c1_i32 = arith.constant 1 : i32
    %0 = arith.muli %arg0, %c1_i32 : i32
    %1 = arith.addi %0, %arg1 : i32
    %c0_i32 = arith.constant 0 : i32
    %c0_i32_0 = arith.constant 0 : i32
    return %1, %c0_i32 : i32, i32
  }
  func.func @transform_1(%arg0: i32, %arg1: i32) -> (i32, i32) {
    %c1_i32 = arith.constant 1 : i32
    %0 = arith.muli %arg0, %c1_i32 : i32
    %1 = arith.addi %0, %arg1 : i32
    %c0_i32 = arith.constant 0 : i32
    %c0_i32_0 = arith.constant 0 : i32
    return %1, %c0_i32 : i32, i32
  }
  func.func @transform_2(%arg0: i32, %arg1: i32) -> (i32, i32) {
    %c0_i32 = arith.constant 0 : i32
    %c0_i32_0 = arith.constant 0 : i32
    return %arg0, %c0_i32 : i32, i32
  }
}

</mosaic_0001>

<llo_original>
// kernel: _weighted_mse_from_parts.1
$region0: #{_weighted_mse_from_parts.1}
  #allocation0 [shape = 'u32[]', space=smem, size = 0x4, offset = 0x4, fixed_abs, tag = 'smem constant byte address 0x4 - core index']
  #allocation1 [shape = 'u32[144,128]{1,0:T(1,128)}', space=vmem, size = 0x12000, scoped, tag = 'internal scratch']
  %s0 = inlined_call_operand.vmem [shape: f32[16,128], index: 0, kind: input, shape index: {}]
  %s1 = inlined_call_operand.vmem [shape: f32[16,128], index: 1, kind: input, shape index: {}]
  %s2 = inlined_call_operand.vmem [shape: f32[8,128], index: 2, kind: output, shape index: {}]
  %s3 = sld [smem:[#allocation0]]
  $region22: #{_weighted_mse_from_parts.1} parent=0
    _
  %s5 = ssub.s32 1, %s3
  %s6 = scalar_select 0, %s5, %s3
  // Predicated region
  $region2: #{_weighted_mse_from_parts.1} parent=0 // pred_check
    _
  $region3: #{_weighted_mse_from_parts.1} parent=0 // pred_check_branch
    %8 = sbr.rel (0) target = $region5
  $region4: #{_weighted_mse_from_parts.1} parent=0 // pred_region
    %s9 = sadd.s32 0, 0
    %s10 = smul.u32 2, %s9
    %p11 = scmp.lt.s32.totalorder %s10, 1
    %s12 = scalar_select %p11, %s10, 1
    %s13 = smul.addr %s12, 8
    %s14 = scalar_lea.vmem %s0, %s13
    %s15 = sadd.s32 0, 0
    %s16 = smul.u32 2, %s15
  $region5: #{_weighted_mse_from_parts.1} parent=0 // pred_fallthru
    _
  // Predicated region
  $region6: #{_weighted_mse_from_parts.1} parent=0 // pred_check
    _
  $region7: #{_weighted_mse_from_parts.1} parent=0 // pred_check_branch
    %18 = sbr.rel (0) target = $region9
  $region8: #{_weighted_mse_from_parts.1} parent=0 // pred_region
    %s19 = sadd.s32 0, 0
    %s20 = smul.u32 2, %s19
    %p21 = scmp.lt.s32.totalorder %s20, 1
    %s22 = scalar_select %p21, %s20, 1
    %s23 = smul.addr %s22, 8
    %s24 = scalar_lea.vmem %s1, %s23
    %s25 = sadd.s32 0, 0
    %s26 = smul.u32 2, %s25
  $region9: #{_weighted_mse_from_parts.1} parent=0 // pred_fallthru
    _
  %s27 = sadd.s32 0, 0
  %s28 = smul.u32 2, %s27
  %p29 = scmp.lt.s32.totalorder %s28, 1
  %s30 = scalar_select %p29, %s28, 1
  %s31 = smul.addr %s30, 8
  %s32 = scalar_lea.vmem %s0, %s31
  %s33 = sadd.s32 0, 0
  %s34 = smul.u32 2, %s33
  %p35 = scmp.lt.s32.totalorder %s34, 1
  %s36 = scalar_select %p35, %s34, 1
  %s37 = smul.addr %s36, 8
  %s38 = scalar_lea.vmem %s1, %s37
  %s39 = sadd.s32 0, 0
  %s40 = smul.u32 2, %s39
  %p41 = scmp.lt.s32.totalorder %s40, 1
  %s42 = scalar_select %p41, %s40, 1
  %s43 = smul.addr %s42, 8
  %s44 = scalar_lea.vmem %s0, %s43
  %s45 = sadd.s32 0, 0
  %s46 = smul.u32 2, %s45
  %s47 = sadd.s32 0, 0
  %s48 = smul.u32 2, %s47
  %p49 = scmp.lt.s32.totalorder %s48, 1
  %s50 = scalar_select %p49, %s48, 1
  %s51 = smul.addr %s50, 8
  %s52 = scalar_lea.vmem %s1, %s51
  %s53 = sadd.s32 0, 0
  %s54 = smul.u32 2, %s53
  %p55 = scmp.eq.s32.totalorder 0, 0
  // Predicated region
  $region10: #{_weighted_mse_from_parts.1} parent=0 // pred_check
    %p56 = pneg %p55
  $region11: #{_weighted_mse_from_parts.1} parent=0 // pred_check_branch
    %58 = sbr.rel (%p56) target = $region13
  $region12: #{_weighted_mse_from_parts.1} parent=0 // pred_region
    %59 = vst [vmem:[%s2] sm:$0xff] 0.0
  $region13: #{_weighted_mse_from_parts.1} parent=0 // pred_fallthru
    _
  %v60 = vld [vmem:[%s44] sm:$0xff]
  %v61 = vld [vmem:[%s44 + $0x8] sm:$0xff]
  %v62 = vld [vmem:[%s52] sm:$0xff]
  %v63 = vld [vmem:[%s52 + $0x8] sm:$0xff]
  %v64 = vsub.f32 %v60, %v62
  %v65 = vsub.f32 %v61, %v63
  %v66 = vmul.f32 %v64, %v64
  %v67 = vmul.f32 %v65, %v65
  %v68 = vld [vmem:[%s2] sm:$0xff]
  %v69 = vadd.f32 %v66, %v67
  %v70 = vadd.f32 %v68, %v69
  %71 = vst [vmem:[%s2] sm:$0xff] %v70
  // Predicated region
  $region14: #{_weighted_mse_from_parts.1} parent=0 // pred_check
    _
  $region15: #{_weighted_mse_from_parts.1} parent=0 // pred_check_branch
    %73 = sbr.rel (0) target = $region17
  $region16: #{_weighted_mse_from_parts.1} parent=0 // pred_region
    _
  $region17: #{_weighted_mse_from_parts.1} parent=0 // pred_fallthru
    _
  // Predicated region
  $region18: #{_weighted_mse_from_parts.1} parent=0 // pred_check
    _
  $region19: #{_weighted_mse_from_parts.1} parent=0 // pred_check_branch
    %75 = sbr.rel (0) target = $region21
  $region20: #{_weighted_mse_from_parts.1} parent=0 // pred_region
    _
  $region21: #{_weighted_mse_from_parts.1} parent=0 // pred_fallthru
    _

</llo_original>
